<compile_context>
chip_gen: v7x
topology: tpu7x:2x2x1
jax: 0.10.0
libtpu: 0.0.40
codegen_flags: <defaults>
</compile_context>

<pallas_src>
import functools

import jax
import jax.numpy as jnp
from jax import lax
from jax.experimental import pallas as pl
from jax.experimental.pallas import tpu as pltpu


def _round_up(x, m):
    return (x + m - 1) // m * m


def _srl_ce_kernel(n_total, scores_ref, labels_ref,
                   losses_ref, csum_ref, ccnt_ref):
    i = pl.program_id(0)
    scores = scores_ref[...].astype(jnp.float32)            # [C, T]
    labels = labels_ref[...]                                 # [1, T] int32
    c, t = scores.shape

    # ---- per-sample cross entropy (stable log-softmax), batch on the lane axis ----
    m = jnp.max(scores, axis=0, keepdims=True)               # [1, T]
    shifted = scores - m                                     # [C, T]
    lse = jnp.log(jnp.sum(jnp.exp(shifted), axis=0, keepdims=True))   # [1, T]
    cls_ids = lax.broadcasted_iota(jnp.int32, (c, t), 0)     # [C, T]
    onehot = cls_ids == labels                               # [C, T] bool
    picked = jnp.sum(jnp.where(onehot, shifted, 0.0), axis=0, keepdims=True)
    losses = lse - picked                                    # [1, T]

    # ---- ragged-tail mask: only true batch columns count (no wrapper-side pad) ----
    col = i * t + lax.broadcasted_iota(jnp.int32, (1, t), 1)
    col_valid = col < n_total                                # [1, T] bool

    # Lane-dense per-sample loss store; OOB lanes of the last partial tile are dropped.
    losses_ref[...] = jnp.where(col_valid, losses, 0.0)

    # ---- lane-wide per-class partials: elementwise VPU adds over 128-lane chunks.
    #      The single cross-lane reduce happens once, in the JAX epilogue.       ----
    cls128 = lax.broadcasted_iota(jnp.int32, (c, 128), 0)    # [C, 128]
    lane_sum = jnp.zeros((c, 128), jnp.float32)
    lane_cnt = jnp.zeros((c, 128), jnp.int32)
    for k in range(t // 128):
        lo, hi = k * 128, (k + 1) * 128
        hit = (cls128 == labels[:, lo:hi]) & col_valid[:, lo:hi]      # [C, 128]
        lane_sum = lane_sum + jnp.where(hit, losses[:, lo:hi], 0.0)   # select, not mul (NaN-safe)
        lane_cnt = lane_cnt + hit.astype(jnp.int32)                   # exact integer counts
    csum_ref[0, :, :] = lane_sum
    ccnt_ref[0, :, :] = lane_cnt


def _derive_tile(n, c, elem_bytes, tile_n):
    # Double-buffered per-column footprint: scores (C*eb) + labels (4) + losses (4).
    # 8 MiB budget fits the default scoped VMEM on v5e (16), v6e (32) and v7x (32 MiB).
    budget = 8 * 1024 * 1024
    per_col = 2 * (c * elem_bytes + 4 + 4)
    cap = max(128, (budget // per_col) // 128 * 128)
    return max(128, min(_round_up(tile_n, 128), cap, _round_up(n, 128)))


def srl_ce_loss(scores, labels, *, scores_transposed=False, tile_n=8192):
    """SRL_CELoss forward tensor math.

    Returns (mean_loss, per_class_mean_losses [C], per_sample_losses [N]).

    scores: [N, C] (module layout) or, preferably, an already lane-dense [C, N]
            slab with scores_transposed=True (saves one full HBM pass).  bf16 is
            recommended for the scores stream; compute is f32 in-kernel.
    labels: [N] integer class ids in [0, C).
    """
    if scores_transposed:
        scores_cn = scores                       # [C, N], produced lane-dense
    else:
        # Module-layout fallback; costs one extra HBM pass over scores.  Producers
        # should emit the [C, N] slab directly (e.g. compute scores as W @ X^T).
        scores_cn = jnp.transpose(scores)
    c, n = scores_cn.shape
    labels_row = labels.astype(jnp.int32).reshape(1, n)      # labels.long().view(-1)

    elem_bytes = jnp.dtype(scores_cn.dtype).itemsize
    tile = _derive_tile(n, c, elem_bytes, tile_n)
    n_blocks = pl.cdiv(n, tile)

    cost = pl.CostEstimate(
        flops=int(10 * n_blocks * tile * c),
        transcendentals=int(n_blocks * tile * (c + 1)),       # exp per element + log per column
        bytes_accessed=int(n * c * elem_bytes + 2 * n * 4 + n_blocks * c * 128 * 8),
    )

    out_shapes = (
        jax.ShapeDtypeStruct((1, n), jnp.float32),             # per-sample losses (lane dense)
        jax.ShapeDtypeStruct((n_blocks, c, 128), jnp.float32),  # per-tile lane-wide class sums
        jax.ShapeDtypeStruct((n_blocks, c, 128), jnp.int32),    # per-tile lane-wide class counts
    )

    losses, csum_p, ccnt_p = pl.pallas_call(
        functools.partial(_srl_ce_kernel, n),
        out_shape=out_shapes,
        grid=(n_blocks,),
        in_specs=[
            pl.BlockSpec((c, tile), lambda i: (0, i)),        # scores [C, N] tiled along lanes
            pl.BlockSpec((1, tile), lambda i: (0, i)),        # labels [1, N] tiled along lanes
        ],
        out_specs=(
            pl.BlockSpec((1, tile), lambda i: (0, i)),        # per-sample losses
            pl.BlockSpec((1, c, 128), lambda i: (i, 0, 0)),   # per-tile class-sum partial slab
            pl.BlockSpec((1, c, 128), lambda i: (i, 0, 0)),   # per-tile class-count partial slab
        ),
        compiler_params=pltpu.CompilerParams(
            # Every grid step is independent (per-block partial outputs), so the
            # batch-tile axis is 'parallel' -> v7x's two TensorCores split N.
            dimension_semantics=("parallel",),
        ),
        cost_estimate=cost,
    )(scores_cn, labels_row)

    # Tiny JAX epilogue: one cross-lane reduce + the divides.
    class_sum = jnp.sum(csum_p, axis=(0, 2))                  # [C] f32
    class_cnt = jnp.sum(ccnt_p, axis=(0, 2))                  # [C] int32 (exact)
    per_class = class_sum / class_cnt.astype(jnp.float32)     # 0/0 -> NaN for empty classes
    loss = jnp.sum(class_sum) * jnp.float32(1.0 / n)          # labels assumed in [0, C)
    return loss, per_class, losses[0]


def _reference(scores_nc, labels, num_classes):
    logp = jax.nn.log_softmax(scores_nc.astype(jnp.float32), axis=1)
    losses = -logp[jnp.arange(scores_nc.shape[0]), labels]
    per_class = []
    for i in range(num_classes):
        mask = (labels == i).astype(jnp.float32)
        per_class.append(jnp.sum(losses * mask) / jnp.sum(mask))
    return jnp.mean(losses), jnp.stack(per_class), losses


if __name__ == "__main__":
    # num_classes = len(sampler.sample_agents) -> 4.  Small batch that is NOT a
    # multiple of 128 so the ragged-tail masking and a multi-tile grid are exercised.
    N, C = 200, 4
    key = jax.random.PRNGKey(0)
    k_scores, k_labels = jax.random.split(key)

    # Module bookkeeping (host side): alphas zeros at __init__, rates = softmax(alphas/T).
    alphas = jnp.zeros((C,), dtype=jnp.float32)
    sample_rates = jax.nn.softmax(alphas / 1.0, axis=0)
    # TODO(synk): sampler.update(sample_rates) / optimizer step are host-side only.

    scores_nc = jax.random.normal(k_scores, (N, C), dtype=jnp.float32)   # module layout [N, C]
    # Leave class C-1 empty so the empty-class NaN semantics are checked too.
    labels = jax.random.randint(k_labels, (N,), 0, C - 1, dtype=jnp.int32)

    # Recommended fast path: producer-side lane-dense [C, N] slab in bf16.
    scores_cn = jnp.asarray(scores_nc.T, dtype=jnp.bfloat16)

    # tile_n=128 here only to force a 2-block grid at this tiny demo size; the
    # production default (8192) is used when tile_n is left unspecified.
    loss, per_class, losses = srl_ce_loss(scores_cn, labels,
                                          scores_transposed=True, tile_n=128)
    jax.block_until_ready((loss, per_class, losses))

    # Reference sees the same bf16-quantized scores, upcast to f32.
    ref_loss, ref_per_class, ref_losses = _reference(
        scores_cn.astype(jnp.float32).T, labels, C)

    import numpy as np
    np.testing.assert_allclose(np.asarray(loss), np.asarray(ref_loss), rtol=1e-5, atol=1e-5)
    np.testing.assert_allclose(np.asarray(losses), np.asarray(ref_losses), rtol=1e-5, atol=1e-5)
    np.testing.assert_allclose(np.asarray(per_class), np.asarray(ref_per_class),
                               rtol=1e-5, atol=1e-5)          # equal_nan=True by default
    assert bool(jnp.isnan(per_class[-1]))                     # empty class -> NaN, like torch .mean()

    print("KERNEL_OK")
</pallas_src>

<mosaic_0001>
module attributes {stable_mosaic.version = 11 : i64} {
  func.func @_srl_ce_kernel(%arg0: i32, %arg1: memref<4x128xbf16, #tpu.memory_space<vmem>>, %arg2: memref<1x128xi32, #tpu.memory_space<vmem>>, %arg3: memref<1x128xf32, #tpu.memory_space<vmem>>, %arg4: memref<1x4x128xf32, #tpu.memory_space<vmem>>, %arg5: memref<1x4x128xi32, #tpu.memory_space<vmem>>) attributes {dimension_semantics = [#tpu.dimension_semantics<parallel>], iteration_bounds = array<i64: 2>, scalar_prefetch = 0 : i64, scratch_operands = 0 : i64, tpu.core_type = #tpu.core_type<tc>, window_params = [{transform_indices = @transform_0, window_bounds = array<i64: 4, 128>}, {transform_indices = @transform_1, window_bounds = array<i64: 1, 128>}, {transform_indices = @transform_2, window_bounds = array<i64: 1, 128>}, {transform_indices = @transform_3, window_bounds = array<i64: 1, 4, 128>}, {transform_indices = @transform_4, window_bounds = array<i64: 1, 4, 128>}]} {
    %c0 = arith.constant 0 : index
    %c0_0 = arith.constant 0 : index
    %0 = vector.load %arg1[%c0, %c0_0] : memref<4x128xbf16, #tpu.memory_space<vmem>>, vector<4x128xbf16>
    %1 = arith.extf %0 : vector<4x128xbf16> to vector<4x128xf32>
    %c0_1 = arith.constant 0 : index
    %c0_2 = arith.constant 0 : index
    %2 = vector.load %arg2[%c0_1, %c0_2] : memref<1x128xi32, #tpu.memory_space<vmem>>, vector<1x128xi32>
    %cst = arith.constant dense<0xFF800000> : vector<128xf32>
    %3 = vector.multi_reduction <maximumf>, %1, %cst [0] : vector<4x128xf32> to vector<128xf32>
    %4 = vector.shape_cast %3 : vector<128xf32> to vector<1x128xf32>
    %5 = vector.broadcast %4 : vector<1x128xf32> to vector<4x128xf32>
    %6 = arith.subf %1, %5 : vector<4x128xf32>
    %7 = math.exp %6 : vector<4x128xf32>
    %cst_3 = arith.constant dense<0.000000e+00> : vector<128xf32>
    %8 = vector.multi_reduction <add>, %7, %cst_3 [0] : vector<4x128xf32> to vector<128xf32>
    %9 = vector.shape_cast %8 : vector<128xf32> to vector<1x128xf32>
    %10 = math.log %9 : vector<1x128xf32>
    %11 = tpu.iota {dimensions = array<i32: 0>} : vector<4x128xi32>
    %12 = vector.broadcast %2 : vector<1x128xi32> to vector<4x128xi32>
    %13 = arith.cmpi eq, %11, %12 : vector<4x128xi32>
    %cst_4 = arith.constant 0.000000e+00 : f32
    %14 = vector.broadcast %cst_4 : f32 to vector<4x128xf32>
    %15 = arith.select %13, %6, %14 : vector<4x128xi1>, vector<4x128xf32>
    %cst_5 = arith.constant dense<0.000000e+00> : vector<128xf32>
    %16 = vector.multi_reduction <add>, %15, %cst_5 [0] : vector<4x128xf32> to vector<128xf32>
    %17 = vector.shape_cast %16 : vector<128xf32> to vector<1x128xf32>
    %18 = arith.subf %10, %17 : vector<1x128xf32>
    %c128_i32 = arith.constant 128 : i32
    %19 = arith.muli %arg0, %c128_i32 : i32
    %20 = tpu.iota {dimensions = array<i32: 1>} : vector<1x128xi32>
    %21 = vector.broadcast %19 : i32 to vector<1x128xi32>
    %22 = arith.addi %21, %20 : vector<1x128xi32>
    %c200_i32 = arith.constant 200 : i32
    %23 = vector.broadcast %c200_i32 : i32 to vector<1x128xi32>
    %24 = arith.cmpi slt, %22, %23 : vector<1x128xi32>
    %cst_6 = arith.constant 0.000000e+00 : f32
    %25 = vector.broadcast %cst_6 : f32 to vector<1x128xf32>
    %26 = arith.select %24, %18, %25 : vector<1x128xi1>, vector<1x128xf32>
    %c0_7 = arith.constant 0 : index
    %c0_8 = arith.constant 0 : index
    %27 = vector.load %arg3[%c0_7, %c0_8] : memref<1x128xf32, #tpu.memory_space<vmem>>, vector<1x128xf32>
    tpu.vector_store %arg3[%c0_7, %c0_8], %26 {strides = array<i32>} : memref<1x128xf32, #tpu.memory_space<vmem>>, vector<1x128xf32>,
    %28 = tpu.iota {dimensions = array<i32: 0>} : vector<4x128xi32>
    %cst_9 = arith.constant 0.000000e+00 : f32
    %29 = vector.broadcast %cst_9 : f32 to vector<4x128xf32>
    %c0_i32 = arith.constant 0 : i32
    %30 = vector.broadcast %c0_i32 : i32 to vector<4x128xi32>
    %31 = vector.broadcast %2 : vector<1x128xi32> to vector<4x128xi32>
    %32 = arith.cmpi eq, %28, %31 : vector<4x128xi32>
    %33 = vector.broadcast %24 : vector<1x128xi1> to vector<4x128xi1>
    %34 = arith.andi %32, %33 : vector<4x128xi1>
    %cst_10 = arith.constant 0.000000e+00 : f32
    %35 = vector.shape_cast %18 : vector<1x128xf32> to vector<1x128xf32>
    %36 = vector.broadcast %35 : vector<1x128xf32> to vector<4x128xf32>
    %37 = vector.broadcast %cst_10 : f32 to vector<4x128xf32>
    %38 = arith.select %34, %36, %37 : vector<4x128xi1>, vector<4x128xf32>
    %39 = arith.addf %29, %38 : vector<4x128xf32>
    %40 = arith.extui %34 : vector<4x128xi1> to vector<4x128xi32>
    %41 = arith.addi %30, %40 : vector<4x128xi32>
    %c0_11 = arith.constant 0 : index
    %c0_12 = arith.constant 0 : index
    %c0_13 = arith.constant 0 : index
    %42 = vector.load %arg4[%c0_11, %c0_12, %c0_13] : memref<1x4x128xf32, #tpu.memory_space<vmem>>, vector<1x4x128xf32>
    %43 = vector.shape_cast %42 : vector<1x4x128xf32> to vector<4x128xf32>
    %44 = vector.shape_cast %39 : vector<4x128xf32> to vector<1x4x128xf32>
    tpu.vector_store %arg4[%c0_11, %c0_12, %c0_13], %44 {strides = array<i32>} : memref<1x4x128xf32, #tpu.memory_space<vmem>>, vector<1x4x128xf32>,
    %c0_14 = arith.constant 0 : index
    %c0_15 = arith.constant 0 : index
    %c0_16 = arith.constant 0 : index
    %45 = vector.load %arg5[%c0_14, %c0_15, %c0_16] : memref<1x4x128xi32, #tpu.memory_space<vmem>>, vector<1x4x128xi32>
    %46 = vector.shape_cast %45 : vector<1x4x128xi32> to vector<4x128xi32>
    %47 = vector.shape_cast %41 : vector<4x128xi32> to vector<1x4x128xi32>
    tpu.vector_store %arg5[%c0_14, %c0_15, %c0_16], %47 {strides = array<i32>} : memref<1x4x128xi32, #tpu.memory_space<vmem>>, vector<1x4x128xi32>,
    return
  }
  func.func @transform_0(%arg0: i32) -> (i32, i32) {
    %c0_i32 = arith.constant 0 : i32
    %c0_i32_0 = arith.constant 0 : i32
    return %c0_i32, %arg0 : i32, i32
  }
  func.func @transform_1(%arg0: i32) -> (i32, i32) {
    %c0_i32 = arith.constant 0 : i32
    %c0_i32_0 = arith.constant 0 : i32
    return %c0_i32, %arg0 : i32, i32
  }
  func.func @transform_2(%arg0: i32) -> (i32, i32) {
    %c0_i32 = arith.constant 0 : i32
    %c0_i32_0 = arith.constant 0 : i32
    return %c0_i32, %arg0 : i32, i32
  }
  func.func @transform_3(%arg0: i32) -> (i32, i32, i32) {
    %c0_i32 = arith.constant 0 : i32
    %c0_i32_0 = arith.constant 0 : i32
    %c0_i32_1 = arith.constant 0 : i32
    return %arg0, %c0_i32, %c0_i32_0 : i32, i32, i32
  }
  func.func @transform_4(%arg0: i32) -> (i32, i32, i32) {
    %c0_i32 = arith.constant 0 : i32
    %c0_i32_0 = arith.constant 0 : i32
    %c0_i32_1 = arith.constant 0 : i32
    return %arg0, %c0_i32, %c0_i32_0 : i32, i32, i32
  }
}

</mosaic_0001>

<llo_original>
// kernel: tpu_custom_call.1
$region0: #{tpu_custom_call.1}
  #allocation0 [shape = 'u32[]', space=smem, size = 0x4, offset = 0x4, fixed_abs, tag = 'smem constant byte address 0x4 - core index']
  #allocation1 [shape = 'u32[144,128]{1,0:T(1,128)}', space=vmem, size = 0x12000, scoped, tag = 'internal scratch']
  %s0 = inlined_call_operand.hbm [shape: bf16[4,200], index: 0, kind: input, shape index: {}]
  %s1 = inlined_call_operand.vmem [shape: s32[1,200], index: 1, kind: input, shape index: {}]
  %s2 = inlined_call_operand.hbm [shape: f32[1,200], index: 2, kind: output, shape index: {0}]
  %s3 = inlined_call_operand.hbm [shape: f32[2,4,128], index: 3, kind: output, shape index: {1}]
  %s4 = inlined_call_operand.hbm [shape: s32[2,4,128], index: 4, kind: output, shape index: {2}]
  %5 = xla_tuple %s2, %s3, %s4
  %s6 = sld [smem:[#allocation0]]
  $region61: #{tpu_custom_call.1} parent=0
    _
  %s8 = ssub.s32 1, %s6
  %s9 = scalar_select 0, %s8, %s6
  $region1: #{tpu_custom_call.1} parent=0
    #allocation2 [shape = 'u8[2048]{0}', space=vmem, size = 0x800, scoped, tag = 'input window, operand 0']
    #allocation3 [shape = 's32[2]{0}', space=sflag, size = 0x8, scoped, tag = 'scoped memory for tpu_custom_call.1']
    #allocation4 [shape = 's32[2]{0}', space=sflag, size = 0x8, scoped, tag = 'scoped memory for tpu_custom_call.1']
    #allocation5 [shape = 'u8[1024]{0}', space=vmem, size = 0x400, scoped, tag = 'output window, operand 0']
    #allocation6 [shape = 'u8[4096]{0}', space=vmem, size = 0x1000, scoped, tag = 'output window, operand 1']
    #allocation7 [shape = 's32[2]{0}', space=sflag, size = 0x8, scoped, tag = 'scoped memory for tpu_custom_call.1']
    #allocation8 [shape = 'u8[4096]{0}', space=vmem, size = 0x1000, scoped, tag = 'output window, operand 2']
    %10 = vsyncpa [#allocation3], 0
    %s11 = scalar_lea.sflag [#allocation3], 1
    %12 = vsyncpa %s11, 0
    %13 = vsyncpa [#allocation4], 0
    %s14 = scalar_lea.sflag [#allocation4], 1
    %15 = vsyncpa %s14, 0
    %16 = vsyncpa [#allocation7], 0
    %s17 = scalar_lea.sflag [#allocation7], 1
    %18 = vsyncpa %s17, 0
    loop: start=0, step=1, limit=4
    $region2: #{tpu_custom_call.1} parent=1 // loop_pre_header
      _
    $region3: #{tpu_custom_call.1} parent=1 // loop_header
      %s20 = sphi 0, %s24
      %p21 = scmp.ge.s32.totalorder %s20, 4
      %s30 = sphi 0, %s32
      %s33 = sphi 0, %s30
      %s34 = sphi 0, %s33
      %s50 = sphi 0, %s34
      %s56 = sphi 0, %s58
      %s59 = sphi 0, %s56
      %s60 = sphi 0, %s59
      %s76 = sphi 0, %s60
      %s82 = sphi 0, %s84
      %s85 = sphi 0, %s82
      %s86 = sphi 0, %s85
      %s102 = sphi 0, %s86
      %s108 = sphi 0, %s110
      %s111 = sphi 0, %s108
      %s112 = sphi 0, %s111
      %s128 = sphi 0, %s112
      %s134 = sphi 0, %s136
      %s137 = sphi 0, %s134
      %s138 = sphi 0, %s137
      %s154 = sphi 0, %s138
    $region4: #{tpu_custom_call.1} parent=1 // loop_header_branch
      %23 = sbr.rel (%p21) target = $region8
    $region5: #{tpu_custom_call.1} parent=1 // loop_body
      %s25 = ssub.s32 %s20, 1
      %s26 = ssub.s32 %s20, 2
      %s27 = sadd.s32 %s20, 1
      %s28 = ssub.s32 %s20, %s27
      %p29 = scmp.eq.s32.totalorder %s28, 0
      %s31 = sadd.s32 %s30, 1
      %s32 = scalar_select %p29, %s30, %s31
      %p35 = pneg %p29
      %p36 = scmp.eq.s32.totalorder %s20, 1
      %p37 = por %p35, %p36
      %p38 = scmp.ne.s32.totalorder %s30, %s33
      %p39 = scmp.eq.s32.totalorder %s20, 0
      %p40 = por %p38, %p39
      %p41 = scmp.ne.s32.totalorder %s30, %s33
      %p42 = scmp.eq.s32.totalorder %s25, 1
      %p43 = por %p41, %p42
      %p44 = scmp.ne.s32.totalorder %s33, %s34
      %p45 = scmp.eq.s32.totalorder %s25, 0
      %p46 = por %p44, %p45
      %p47 = scmp.ne.s32.totalorder %s33, %s34
      %p48 = scmp.eq.s32.totalorder %s26, 1
      %p49 = por %p47, %p48
      %p51 = scmp.ne.s32.totalorder %s34, %s50
      %p52 = scmp.eq.s32.totalorder %s26, 0
      %p53 = por %p51, %p52
      %s54 = ssub.s32 %s20, %s27
      %p55 = scmp.eq.s32.totalorder %s54, 0
      %s57 = sadd.s32 %s56, 1
      %s58 = scalar_select %p55, %s56, %s57
      %p61 = pneg %p55
      %p62 = scmp.eq.s32.totalorder %s20, 1
      %p63 = por %p61, %p62
      %p64 = scmp.ne.s32.totalorder %s56, %s59
      %p65 = scmp.eq.s32.totalorder %s20, 0
      %p66 = por %p64, %p65
      %p67 = scmp.ne.s32.totalorder %s56, %s59
      %p68 = scmp.eq.s32.totalorder %s25, 1
      %p69 = por %p67, %p68
      %p70 = scmp.ne.s32.totalorder %s59, %s60
      %p71 = scmp.eq.s32.totalorder %s25, 0
      %p72 = por %p70, %p71
      %p73 = scmp.ne.s32.totalorder %s59, %s60
      %p74 = scmp.eq.s32.totalorder %s26, 1
      %p75 = por %p73, %p74
      %p77 = scmp.ne.s32.totalorder %s60, %s76
      %p78 = scmp.eq.s32.totalorder %s26, 0
      %p79 = por %p77, %p78
      %s80 = ssub.s32 %s20, %s27
      %p81 = scmp.eq.s32.totalorder %s80, 0
      %s83 = sadd.s32 %s82, 1
      %s84 = scalar_select %p81, %s82, %s83
      %p87 = pneg %p81
      %p88 = scmp.eq.s32.totalorder %s20, 1
      %p89 = por %p87, %p88
      %p90 = scmp.ne.s32.totalorder %s82, %s85
      %p91 = scmp.eq.s32.totalorder %s20, 0
      %p92 = por %p90, %p91
      %p93 = scmp.ne.s32.totalorder %s82, %s85
      %p94 = scmp.eq.s32.totalorder %s25, 1
      %p95 = por %p93, %p94
      %p96 = scmp.ne.s32.totalorder %s85, %s86
      %p97 = scmp.eq.s32.totalorder %s25, 0
      %p98 = por %p96, %p97
      %p99 = scmp.ne.s32.totalorder %s85, %s86
      %p100 = scmp.eq.s32.totalorder %s26, 1
      %p101 = por %p99, %p100
      %p103 = scmp.ne.s32.totalorder %s86, %s102
      %p104 = scmp.eq.s32.totalorder %s26, 0
      %p105 = por %p103, %p104
      %s106 = ssub.s32 %s20, %s27
      %p107 = scmp.eq.s32.totalorder %s106, 0
      %s109 = sadd.s32 %s108, 1
      %s110 = scalar_select %p107, %s108, %s109
      %p113 = pneg %p107
      %p114 = scmp.eq.s32.totalorder %s20, 1
      %p115 = por %p113, %p114
      %p116 = scmp.ne.s32.totalorder %s108, %s111
      %p117 = scmp.eq.s32.totalorder %s20, 0
      %p118 = por %p116, %p117
      %p119 = scmp.ne.s32.totalorder %s108, %s111
      %p120 = scmp.eq.s32.totalorder %s25, 1
      %p121 = por %p119, %p120
      %p122 = scmp.ne.s32.totalorder %s111, %s112
      %p123 = scmp.eq.s32.totalorder %s25, 0
      %p124 = por %p122, %p123
      %p125 = scmp.ne.s32.totalorder %s111, %s112
      %p126 = scmp.eq.s32.totalorder %s26, 1
      %p127 = por %p125, %p126
      %p129 = scmp.ne.s32.totalorder %s112, %s128
      %p130 = scmp.eq.s32.totalorder %s26, 0
      %p131 = por %p129, %p130
      %s132 = ssub.s32 %s20, %s27
      %p133 = scmp.eq.s32.totalorder %s132, 0
      %s135 = sadd.s32 %s134, 1
      %s136 = scalar_select %p133, %s134, %s135
      %p139 = pneg %p133
      %p140 = scmp.eq.s32.totalorder %s20, 1
      %p141 = por %p139, %p140
      %p142 = scmp.ne.s32.totalorder %s134, %s137
      %p143 = scmp.eq.s32.totalorder %s20, 0
      %p144 = por %p142, %p143
      %p145 = scmp.ne.s32.totalorder %s134, %s137
      %p146 = scmp.eq.s32.totalorder %s25, 1
      %p147 = por %p145, %p146
      %p148 = scmp.ne.s32.totalorder %s137, %s138
      %p149 = scmp.eq.s32.totalorder %s25, 0
      %p150 = por %p148, %p149
      %p151 = scmp.ne.s32.totalorder %s137, %s138
      %p152 = scmp.eq.s32.totalorder %s26, 1
      %p153 = por %p151, %p152
      %p155 = scmp.ne.s32.totalorder %s138, %s154
      %p156 = scmp.eq.s32.totalorder %s26, 0
      %p157 = por %p155, %p156
      %p158 = scmp.le.s32.totalorder 1, %s20
      %p159 = scmp.lt.s32.totalorder %s20, 3
      %p160 = pnand %p158, %p159
      %p161 = pneg %p160
      // Predicated region
      $region9: #{tpu_custom_call.1} parent=5 // pred_check
        _
      $region10: #{tpu_custom_call.1} parent=5 // pred_check_branch
        %163 = sbr.rel (%p160) target = $region12
      $region11: #{tpu_custom_call.1} parent=5 // pred_region
        %s164 = ssub.s32 %s20, 1
      $region12: #{tpu_custom_call.1} parent=5 // pred_fallthru
        _
      %p165 = scmp.lt.s32.totalorder %s20, 2
      // Predicated region
      $region13: #{tpu_custom_call.1} parent=5 // pred_check
        %p166 = pneg %p165
      $region14: #{tpu_custom_call.1} parent=5 // pred_check_branch
        %168 = sbr.rel (%p166) target = $region16
      $region15: #{tpu_custom_call.1} parent=5 // pred_region
        // Predicated region
        $region17: #{tpu_custom_call.1} parent=15 // pred_check
          %p169 = pneg %p40
        $region18: #{tpu_custom_call.1} parent=15 // pred_check_branch
          %171 = sbr.rel (%p169) target = $region20
        $region19: #{tpu_custom_call.1} parent=15 // pred_region
          %s172 = sand.u32 %s30, 1
          %s173 = scalar_lea.sflag [#allocation3], %s172
          %s174 = sand.u32 %s30, 1
          %s175 = smul.addr %s174, 2
          %s176 = scalar_lea.vmem [#allocation2], %s175
          %s178 = ssub.s32 32, 32
          %179 = vsyncadd %s173, %s178
          %s180 = smul.addr %s20, 32
          %s181 = scalar_lea.hbm %s0, %s180
          %s183 = sshll.u32 %s176, 4
          %s184 = int_to_ptr.vmem [resolvable:$true] %s183
          %186 = dma.hbm_to_vmem [thread:$0]  %s181, 32, %s184, %s173
        $region20: #{tpu_custom_call.1} parent=15 // pred_fallthru
          _
        // Predicated region
        $region21: #{tpu_custom_call.1} parent=15 // pred_check
          %p187 = pneg %p66
        $region22: #{tpu_custom_call.1} parent=15 // pred_check_branch
          %189 = sbr.rel (%p187) target = $region24
        $region23: #{tpu_custom_call.1} parent=15 // pred_region
          %p190 = scmp.lt.s32.totalorder %s20, 1
          %s191 = scalar_select %p190, %s20, 1
          %s192 = scalar_lea.vmem %s1, %s191
        $region24: #{tpu_custom_call.1} parent=15 // pred_fallthru
          _
      $region16: #{tpu_custom_call.1} parent=5 // pred_fallthru
        _
      %p193 = scmp.le.s32.totalorder 1, %s20
      %p194 = scmp.lt.s32.totalorder %s20, 3
      %p195 = pnand %p193, %p194
      %p196 = pneg %p195
      // Predicated region
      $region25: #{tpu_custom_call.1} parent=5 // pred_check
        _
      $region26: #{tpu_custom_call.1} parent=5 // pred_check_branch
        %198 = sbr.rel (%p195) target = $region28
      $region27: #{tpu_custom_call.1} parent=5 // pred_region
        %s199 = ssub.s32 %s20, 1
        %s200 = sand.u32 %s33, 1
        %s201 = scalar_lea.sflag [#allocation3], %s200
        %s202 = sand.u32 %s33, 1
        %s203 = smul.addr %s202, 2
        %s204 = scalar_lea.vmem [#allocation2], %s203
        // Predicated region
        $region29: #{tpu_custom_call.1} parent=27 // pred_check
          %p205 = pneg %p46
        $region30: #{tpu_custom_call.1} parent=27 // pred_check_branch
          %207 = sbr.rel (%p205) target = $region32
        $region31: #{tpu_custom_call.1} parent=27 // pred_region
          %208 = dma.done %s201, 32
        $region32: #{tpu_custom_call.1} parent=27 // pred_fallthru
          _
        %s209 = sand.u32 %s33, 1
        %s210 = scalar_lea.sflag [#allocation3], %s209
        %s211 = sand.u32 %s33, 1
        %s212 = smul.addr %s211, 2
        %s213 = scalar_lea.vmem [#allocation2], %s212
        %p214 = pneg %p46
        %p215 = pneg %p43
        %p216 = scmp.lt.s32.totalorder %s25, 1
        %s217 = scalar_select %p216, %s25, 1
        %s218 = scalar_lea.vmem %s1, %s217
        %p219 = pneg %p72
        %p220 = pneg %p69
        %p221 = pneg %p98
        %p222 = pneg %p95
        %s223 = sand.u32 %s85, 1
        %s224 = scalar_lea.sflag [#allocation4], %s223
        %s225 = sand.u32 %s85, 1
        %s226 = scalar_lea.vmem [#allocation5], %s225
        %p227 = pneg %p124
        %p228 = pneg %p121
        %s229 = sand.u32 %s25, 1
        %s230 = scalar_lea.sflag [#allocation7], %s229
        %s231 = sand.u32 %s111, 1
        %s232 = smul.addr %s231, 4
        %s233 = scalar_lea.vmem [#allocation6], %s232
        %p234 = pneg %p150
        %p235 = pneg %p147
        %s236 = sand.u32 %s25, 1
        %s237 = scalar_lea.sflag [#allocation7], %s236
        %s238 = sand.u32 %s137, 1
        %s239 = smul.addr %s238, 4
        %s240 = scalar_lea.vmem [#allocation8], %s239
        %p241 = scmp.lt.s32.totalorder %s25, 1
        %s242 = scalar_select %p241, %s25, 1
        %s243 = scalar_lea.vmem %s1, %s242
        %v244 = vld [vmem:[%s204] sm:$0x3]
        %v245 = vunpack.c.l.bf16 %v244
        %v246 = vld [vmem:[%s243] sm:$0x1]
        %vm247 = vcmask 1043456
        %v248 = vsel %vm247, %v245, -inf
        %v249 = vrot.slane %v248, 4
        %v250 = vmax.f32 %v248, %v249
        %v251 = vrot.slane %v250, 2
        %v252 = vmax.f32 %v250, %v251
        %v253 = vrot.slane %v252, 1
        %v254 = vmax.f32 %v252, %v253
        %v255 = vsub.f32 %v245, %v254
        %v256 = vmul.f32 %v255, 1.442695
        %v257 = vpow.pop %v256
        %v258 = vsel %vm247, %v257, 0.0
        %v259 = vrot.slane %v258, 4
        %v260 = vadd.f32 %v258, %v259
        %v261 = vrot.slane %v260, 2
        %v262 = vadd.f32 %v260, %v261
        %v263 = vrot.slane %v262, 1
        %v264 = vadd.f32 %v262, %v263
        %v265 = vlog2.pop %v264
        %v266 = vmul.f32 %v265, 0.6931472
        %v267 = vlaneseq
        %v268 = vshrl.u32 %v267, 7
        %v269 = vlaneseq
        %v270 = vshrl.u32 %v269, 7
        %v271 = vsub.s32 0, %v270
        %v272 = vrot.slane %v246, %v271
        %vm273 = vcmp.eq.s32.totalorder %v268, %v272
        %v274 = vsel %vm273, %v255, 0.0
        %v275 = vsel %vm247, %v274, 0.0
        %v276 = vrot.slane %v275, 4
        %v277 = vadd.f32 %v275, %v276
        %v278 = vrot.slane %v277, 2
        %v279 = vadd.f32 %v277, %v278
        %v280 = vrot.slane %v279, 1
        %v281 = vadd.f32 %v279, %v280
        %v282 = vsub.f32 %v266, %v281
        %s283 = smul.u32 %s25, 128
        %v284 = vlaneseq
        %v285 = vand.u32 %v284, 127
        %v286 = vstv %s283
        %v287 = vadd.s32 %v286, %v285
        %vm288 = vcmp.lt.s32.totalorder %v287, 200
        %v289 = vsel %vm288, %v282, 0.0
        %290 = vst [vmem:[%s226] sm:$0x1] %v289
        %v291 = vsel %vm288, 1, 0
        %vm292 = vcmp.eq.s32.totalorder %v291, 1
        %vm293 = vmand %vm273, %vm292
        %v294 = vsel %vm293, %v282, 0.0
        %v295 = vadd.f32 %v294, 0.0
        %v296 = vsel %vm293, 1, 0
        %297 = vst [vmem:[%s233] sm:$0xf] %v295
        %298 = vst [vmem:[%s240] sm:$0xf] %v296
        %s299 = sand.u32 %s85, 1
        %s300 = scalar_lea.sflag [#allocation4], %s299
        %s301 = sand.u32 %s85, 1
        %s302 = scalar_lea.vmem [#allocation5], %s301
        %s303 = sand.u32 %s25, 1
        %s304 = scalar_lea.sflag [#allocation7], %s303
        %s305 = sand.u32 %s111, 1
        %s306 = smul.addr %s305, 4
        %s307 = scalar_lea.vmem [#allocation6], %s306
        %s308 = sand.u32 %s25, 1
        %s309 = scalar_lea.sflag [#allocation7], %s308
        %s310 = sand.u32 %s137, 1
        %s311 = smul.addr %s310, 4
        %s312 = scalar_lea.vmem [#allocation8], %s311
        // Predicated region
        $region33: #{tpu_custom_call.1} parent=27 // pred_check
          %p313 = pneg %p95
        $region34: #{tpu_custom_call.1} parent=27 // pred_check_branch
          %315 = sbr.rel (%p313) target = $region36
        $region35: #{tpu_custom_call.1} parent=27 // pred_region
          %s317 = ssub.s32 16, 16
          %318 = vsyncadd %s300, %s317
          %s319 = smul.addr %s25, 16
          %s320 = scalar_lea.hbm %s2, %s319
          %s322 = sshll.u32 %s302, 4
          %s323 = int_to_ptr.vmem [resolvable:$true] %s322
          %325 = dma.vmem_to_hbm [thread:$0]  %s323, 16, %s320, %s300
        $region36: #{tpu_custom_call.1} parent=27 // pred_fallthru
          _
        // Predicated region
        $region37: #{tpu_custom_call.1} parent=27 // pred_check
          %p326 = pneg %p121
        $region38: #{tpu_custom_call.1} parent=27 // pred_check_branch
          %328 = sbr.rel (%p326) target = $region40
        $region39: #{tpu_custom_call.1} parent=27 // pred_region
          %s330 = ssub.s32 64, 64
          %331 = vsyncadd %s304, %s330
          %s332 = smul.addr %s25, 64
          %s333 = scalar_lea.hbm %s3, %s332
          %s335 = sshll.u32 %s307, 4
          %s336 = int_to_ptr.vmem [resolvable:$true] %s335
          %338 = dma.vmem_to_hbm [thread:$0]  %s336, 64, %s333, %s304
        $region40: #{tpu_custom_call.1} parent=27 // pred_fallthru
          _
        // Predicated region
        $region41: #{tpu_custom_call.1} parent=27 // pred_check
          %p339 = pneg %p147
        $region42: #{tpu_custom_call.1} parent=27 // pred_check_branch
          %341 = sbr.rel (%p339) target = $region44
        $region43: #{tpu_custom_call.1} parent=27 // pred_region
          %s343 = ssub.s32 64, 64
          %344 = vsyncadd %s309, %s343
          %s345 = smul.addr %s25, 64
          %s346 = scalar_lea.hbm %s4, %s345
          %s348 = sshll.u32 %s312, 4
          %s349 = int_to_ptr.vmem [resolvable:$true] %s348
          %351 = dma.vmem_to_hbm [thread:$0]  %s349, 64, %s346, %s309
        $region44: #{tpu_custom_call.1} parent=27 // pred_fallthru
          _
      $region28: #{tpu_custom_call.1} parent=5 // pred_fallthru
        _
      %p352 = scmp.le.s32.totalorder 2, %s20
      // Predicated region
      $region45: #{tpu_custom_call.1} parent=5 // pred_check
        %p353 = pneg %p352
      $region46: #{tpu_custom_call.1} parent=5 // pred_check_branch
        %355 = sbr.rel (%p353) target = $region48
      $region47: #{tpu_custom_call.1} parent=5 // pred_region
        %s356 = ssub.s32 %s20, 2
        // Predicated region
        $region49: #{tpu_custom_call.1} parent=47 // pred_check
          %p357 = pneg %p101
        $region50: #{tpu_custom_call.1} parent=47 // pred_check_branch
          %359 = sbr.rel (%p357) target = $region52
        $region51: #{tpu_custom_call.1} parent=47 // pred_region
          %s360 = sand.u32 %s86, 1
          %s361 = scalar_lea.sflag [#allocation4], %s360
          %s362 = sand.u32 %s86, 1
          %s363 = scalar_lea.vmem [#allocation5], %s362
          %364 = dma.done %s361, 16
        $region52: #{tpu_custom_call.1} parent=47 // pred_fallthru
          _
        // Predicated region
        $region53: #{tpu_custom_call.1} parent=47 // pred_check
          %p365 = pneg %p127
        $region54: #{tpu_custom_call.1} parent=47 // pred_check_branch
          %367 = sbr.rel (%p365) target = $region56
        $region55: #{tpu_custom_call.1} parent=47 // pred_region
          %s368 = sand.u32 %s26, 1
          %s369 = scalar_lea.sflag [#allocation7], %s368
          %s370 = sand.u32 %s112, 1
          %s371 = smul.addr %s370, 4
          %s372 = scalar_lea.vmem [#allocation6], %s371
          %373 = dma.done %s369, 64
        $region56: #{tpu_custom_call.1} parent=47 // pred_fallthru
          _
        // Predicated region
        $region57: #{tpu_custom_call.1} parent=47 // pred_check
          %p374 = pneg %p153
        $region58: #{tpu_custom_call.1} parent=47 // pred_check_branch
          %376 = sbr.rel (%p374) target = $region60
        $region59: #{tpu_custom_call.1} parent=47 // pred_region
          %s377 = sand.u32 %s26, 1
          %s378 = scalar_lea.sflag [#allocation7], %s377
          %s379 = sand.u32 %s138, 1
          %s380 = smul.addr %s379, 4
          %s381 = scalar_lea.vmem [#allocation8], %s380
          %382 = dma.done %s378, 64
        $region60: #{tpu_custom_call.1} parent=47 // pred_fallthru
          _
      $region48: #{tpu_custom_call.1} parent=5 // pred_fallthru
        _
    $region6: #{tpu_custom_call.1} parent=1 // loop_footer
      %s24 = sadd.s32 1, %s20
    $region7: #{tpu_custom_call.1} parent=1 // loop_footer_branch
      %19 = sbr.rel target = $region3
    $region8: #{tpu_custom_call.1} parent=1 // loop_exit
      _
    %383 = vsyncpa [#allocation3], 1
    %s384 = scalar_lea.sflag [#allocation3], 1
    %385 = vsyncpa %s384, 1
    %386 = vsyncpa [#allocation4], 1
    %s387 = scalar_lea.sflag [#allocation4], 1
    %388 = vsyncpa %s387, 1
    %389 = vsyncpa [#allocation7], 1
    %s390 = scalar_lea.sflag [#allocation7], 1
    %391 = vsyncpa %s390, 1

</llo_original>
